<compile_context>
chip_gen: v5e
topology: v5e:2x2
jax: 0.10.0
libtpu: 0.0.40
codegen_flags: <defaults>
</compile_context>

<pallas_src>
import jax
import jax.numpy as jnp
from jax.experimental import pallas as pl
from jax.experimental.pallas import tpu as pltpu

BP = 8  # padded batch (f32 sublane count)


# ----------------------------------------------------------------------------- kernel
def temporal_attention_kernel(
    x_ref,    # (T*BP, I)  time-major flattened input, batch padded to BP, row = t*BP + b
    p_ref,    # (48, 4H)   parameter slab: [w_ih^T (I rows) | w_hh^T (H rows) | bias | attn_w | pad]
    out_ref,  # (BP, H)    output (rows B..BP-1 are padding, sliced off by the wrapper)
):
    TB, I = x_ref.shape
    Bp, H = out_ref.shape
    T = TB // Bp
    G = 4 * H

    # --- static-offset views into the single parameter slab (all params in 1 DMA)
    w_ih = p_ref[0:I, :]                                     # (I, 4H) f32, rows 0:I (tile-aligned)
    # bf16 operands for the serially-dependent recurrence matmul; f32 accumulation.
    w_hh = p_ref[I:I + H, :].astype(jnp.bfloat16)            # (H, 4H) bf16, one-time cast
    bias = p_ref[I + H:I + H + 1, :]                         # (1, 4H)  (b_ih + b_hh folded)
    aw = p_ref[I + H + 1:I + H + 2, 0:H]                     # (1, H)   attention weight row

    # --- batched input projection for all timesteps + folded bias (one f32 MXU matmul)
    xproj = jnp.dot(x_ref[...], w_ih, preferred_element_type=jnp.float32) + bias  # (T*BP, 4H)

    # --- loop invariants hoisted (JAX does not CSE broadcasts)
    lane = jax.lax.broadcasted_iota(jnp.int32, (Bp, G), 1)
    g_lanes = (lane >= 2 * H) & (lane < 3 * H)               # tanh lanes (g gate), PyTorch order i,f,g,o

    def lstm_cell(pre, c):
        # single EUP push: tanh(z) on g lanes, sigmoid(z) = 0.5*(1 + tanh(z/2)) on i/f/o lanes
        z = jnp.where(g_lanes, pre, 0.5 * pre)
        th = jnp.tanh(z)
        act = jnp.where(g_lanes, th, 0.5 * th + 0.5)
        i_g = act[:, 0 * H:1 * H]
        f_g = act[:, 1 * H:2 * H]
        g_g = act[:, 2 * H:3 * H]
        o_g = act[:, 3 * H:4 * H]
        c = f_g * c + i_g * g_g
        h = o_g * jnp.tanh(c)
        return h, c

    # --- fully unrolled recurrence; h/c and per-step states stay in vregs.
    # Step 0: h == 0, so the h @ w_hh matmul is skipped entirely.
    h, c = lstm_cell(xproj[0:Bp, :], jnp.zeros((Bp, H), jnp.float32))
    hs = [h]
    scores = [jnp.sum(h * aw, axis=-1, keepdims=True)]       # (BP, 1) lane reduction (XLU)
    for t in range(1, T):
        pre = xproj[t * Bp:(t + 1) * Bp, :] + jnp.dot(
            h.astype(jnp.bfloat16), w_hh, preferred_element_type=jnp.float32)
        h, c = lstm_cell(pre, c)
        hs.append(h)
        scores.append(jnp.sum(h * aw, axis=-1, keepdims=True))

    # --- softmax over time + unnormalized weighted sum; single reciprocal at the end.
    m = scores[0]
    for t in range(1, T):
        m = jnp.maximum(m, scores[t])
    e = [jnp.exp(s - m) for s in scores]
    denom = e[0]
    acc = e[0] * hs[0]
    for t in range(1, T):
        denom = denom + e[t]
        acc = acc + e[t] * hs[t]
    out_ref[...] = acc * pl.reciprocal(denom, approx=True)   # (BP, H)


# ----------------------------------------------------------------------------- wrapper
def temporal_attention_layer(x, w_ih, w_hh, b_ih, b_hh, attn_w, attn_b):
    """x: (B, T, in_features) float32.  Returns (B, out_features) float32."""
    B, T, I = x.shape
    H = w_hh.shape[1]                          # w_hh: (4H, H)
    G = 4 * H
    del attn_b  # uniform additive bias on the scores cancels exactly in softmax
    assert B <= BP, "this wrapper pads batch to 8; larger batches need a grid axis"

    # Wrapper-side layout plumbing (free in XLA):
    # time-major input, batch padded to BP sublanes with zero rows.
    x_tm = jnp.transpose(x.astype(jnp.float32), (1, 0, 2))                 # (T, B, I)
    x_flat = jnp.pad(x_tm, ((0, 0), (0, BP - B), (0, 0))).reshape(T * BP, I)

    # Single parameter slab (rows padded to a multiple of 8 for clean (8,128) tiling):
    #   rows [0, I)        : w_ih^T
    #   rows [I, I+H)      : w_hh^T
    #   row   I+H          : b_ih + b_hh
    #   row   I+H+1        : attention weight (first H lanes)
    w_ih_t = jnp.transpose(w_ih).astype(jnp.float32)                       # (I, 4H)
    w_hh_t = jnp.transpose(w_hh).astype(jnp.float32)                       # (H, 4H)
    bias = (b_ih + b_hh).reshape(1, G).astype(jnp.float32)                 # (1, 4H)
    aw_row = jnp.pad(attn_w.reshape(1, H).astype(jnp.float32),
                     ((0, 0), (0, G - H)))                                 # (1, 4H)
    rows = I + H + 2
    rows_pad = -(-rows // 8) * 8
    params = jnp.concatenate([w_ih_t, w_hh_t, bias, aw_row], axis=0)
    params = jnp.pad(params, ((0, rows_pad - rows), (0, 0)))               # (rows_pad, 4H)

    vmem = pl.BlockSpec(memory_space=pltpu.MemorySpace.VMEM)
    out_pad = pl.pallas_call(
        temporal_attention_kernel,
        out_shape=jax.ShapeDtypeStruct((BP, H), jnp.float32),
        in_specs=[vmem, vmem],
        out_specs=vmem,
    )(x_flat, params)
    return out_pad[:B]


# ----------------------------------------------------------------------------- reference
def reference_forward(x, w_ih, w_hh, b_ih, b_hh, attn_w, attn_b):
    B, T, I = x.shape
    H = w_hh.shape[1]

    def step(carry, x_t):
        h, c = carry
        gates = x_t @ w_ih.T + b_ih + h @ w_hh.T + b_hh
        i_g = jax.nn.sigmoid(gates[:, :H])
        f_g = jax.nn.sigmoid(gates[:, H:2 * H])
        g_g = jnp.tanh(gates[:, 2 * H:3 * H])
        o_g = jax.nn.sigmoid(gates[:, 3 * H:])
        c = f_g * c + i_g * g_g
        h = o_g * jnp.tanh(c)
        return (h, c), h

    h0 = jnp.zeros((B, H), jnp.float32)
    c0 = jnp.zeros((B, H), jnp.float32)
    _, hs = jax.lax.scan(step, (h0, c0), jnp.swapaxes(x, 0, 1))
    hs = jnp.swapaxes(hs, 0, 1)                                  # (B, T, H)
    scores = hs @ attn_w.reshape(H, 1) + attn_b                  # (B, T, 1)
    w = jax.nn.softmax(scores, axis=1)
    return jnp.sum(w * hs, axis=1)                               # (B, H)


# ----------------------------------------------------------------------------- main
if __name__ == "__main__":
    B, T = 2, 8
    in_features, out_features = 8, 32
    H = out_features

    key = jax.random.PRNGKey(0)
    ks = jax.random.split(key, 8)
    bound = 1.0 / (H ** 0.5)  # PyTorch LSTM / Linear default init scale

    x = jax.random.normal(ks[0], (B, T, in_features), jnp.float32)
    w_ih = jax.random.uniform(ks[1], (4 * H, in_features), jnp.float32, -bound, bound)
    w_hh = jax.random.uniform(ks[2], (4 * H, H), jnp.float32, -bound, bound)
    b_ih = jax.random.uniform(ks[3], (4 * H,), jnp.float32, -bound, bound)
    b_hh = jax.random.uniform(ks[4], (4 * H,), jnp.float32, -bound, bound)
    attn_w = jax.random.uniform(ks[5], (1, H), jnp.float32, -bound, bound)  # nn.Linear(H, 1).weight
    attn_b = jax.random.uniform(ks[6], (1,), jnp.float32, -bound, bound)

    out = temporal_attention_layer(
        x, w_ih, w_hh, b_ih, b_hh, jnp.transpose(attn_w), attn_b
    )
    out = jax.block_until_ready(out)

    ref = reference_forward(x, w_ih, w_hh, b_ih, b_hh, jnp.transpose(attn_w), attn_b)
    ref = jax.block_until_ready(ref)

    assert out.shape == (B, out_features)
    max_err = float(jnp.max(jnp.abs(out - ref)))
    # Slightly looser tolerance than pure-f32: the recurrence matmul uses bf16 operands
    # (f32 accumulation) per the perf review; measured error stays well inside this.
    assert jnp.allclose(out, ref, atol=2e-3, rtol=2e-3), f"max abs err {max_err}"
    print("KERNEL_OK")
</pallas_src>

<mosaic_0001>
module attributes {stable_mosaic.version = 11 : i64} {
  func.func @temporal_attention_kernel(%arg0: memref<64x8xf32, #tpu.memory_space<vmem>>, %arg1: memref<48x128xf32, #tpu.memory_space<vmem>>, %arg2: memref<8x32xf32, #tpu.memory_space<vmem>>) attributes {dimension_semantics = [], scalar_prefetch = 0 : i64, scratch_operands = 0 : i64, tpu.core_type = #tpu.core_type<tc>} {
    %c0 = arith.constant 0 : index
    %c0_0 = arith.constant 0 : index
    %0 = vector.load %arg1[%c0, %c0_0] : memref<48x128xf32, #tpu.memory_space<vmem>>, vector<8x128xf32>
    %c8 = arith.constant 8 : index
    %c0_1 = arith.constant 0 : index
    %1 = vector.load %arg1[%c8, %c0_1] : memref<48x128xf32, #tpu.memory_space<vmem>>, vector<32x128xf32>
    %2 = arith.truncf %1 : vector<32x128xf32> to vector<32x128xbf16>
    %c40 = arith.constant 40 : index
    %c0_2 = arith.constant 0 : index
    %3 = vector.load %arg1[%c40, %c0_2] : memref<48x128xf32, #tpu.memory_space<vmem>>, vector<1x128xf32>
    %c41 = arith.constant 41 : index
    %c0_3 = arith.constant 0 : index
    %4 = vector.load %arg1[%c41, %c0_3] : memref<48x128xf32, #tpu.memory_space<vmem>>, vector<1x32xf32>
    %c0_4 = arith.constant 0 : index
    %c0_5 = arith.constant 0 : index
    %5 = vector.load %arg0[%c0_4, %c0_5] : memref<64x8xf32, #tpu.memory_space<vmem>>, vector<64x8xf32>
    %cst = arith.constant dense<0.000000e+00> : vector<64x128xf32>
    %6 = tpu.matmul %5, %0, %cst {dimension_numbers = #tpu.dot_dimension_numbers<[1], [0], [0], [1], [0, 0, 1, 1], [], []>} : vector<64x8xf32>, vector<8x128xf32>, vector<64x128xf32> -> vector<64x128xf32>
    %7 = vector.broadcast %3 : vector<1x128xf32> to vector<64x128xf32>
    %8 = arith.addf %6, %7 : vector<64x128xf32>
    %9 = tpu.iota {dimensions = array<i32: 1>} : vector<8x128xi32>
    %c64_i32 = arith.constant 64 : i32
    %10 = vector.broadcast %c64_i32 : i32 to vector<8x128xi32>
    %11 = arith.cmpi sge, %9, %10 : vector<8x128xi32>
    %c96_i32 = arith.constant 96 : i32
    %12 = vector.broadcast %c96_i32 : i32 to vector<8x128xi32>
    %13 = arith.cmpi slt, %9, %12 : vector<8x128xi32>
    %14 = arith.andi %11, %13 : vector<8x128xi1>
    %15 = vector.extract_strided_slice %8 {offsets = [0, 0], sizes = [8, 128], strides = [1, 1]} : vector<64x128xf32> to vector<8x128xf32>
    %cst_6 = arith.constant 0.000000e+00 : f32
    %16 = vector.broadcast %cst_6 : f32 to vector<8x32xf32>
    %cst_7 = arith.constant 5.000000e-01 : f32
    %17 = vector.broadcast %cst_7 : f32 to vector<8x128xf32>
    %18 = arith.mulf %17, %15 : vector<8x128xf32>
    %19 = arith.select %14, %15, %18 : vector<8x128xi1>, vector<8x128xf32>
    %20 = math.tanh %19 : vector<8x128xf32>
    %cst_8 = arith.constant 5.000000e-01 : f32
    %21 = vector.broadcast %cst_8 : f32 to vector<8x128xf32>
    %22 = arith.mulf %21, %20 : vector<8x128xf32>
    %cst_9 = arith.constant 5.000000e-01 : f32
    %23 = vector.broadcast %cst_9 : f32 to vector<8x128xf32>
    %24 = arith.addf %22, %23 : vector<8x128xf32>
    %25 = arith.select %14, %20, %24 : vector<8x128xi1>, vector<8x128xf32>
    %26 = vector.extract_strided_slice %25 {offsets = [0, 0], sizes = [8, 32], strides = [1, 1]} : vector<8x128xf32> to vector<8x32xf32>
    %27 = vector.extract_strided_slice %25 {offsets = [0, 32], sizes = [8, 32], strides = [1, 1]} : vector<8x128xf32> to vector<8x32xf32>
    %28 = vector.extract_strided_slice %25 {offsets = [0, 64], sizes = [8, 32], strides = [1, 1]} : vector<8x128xf32> to vector<8x32xf32>
    %29 = vector.extract_strided_slice %25 {offsets = [0, 96], sizes = [8, 32], strides = [1, 1]} : vector<8x128xf32> to vector<8x32xf32>
    %30 = arith.mulf %27, %16 : vector<8x32xf32>
    %31 = arith.mulf %26, %28 : vector<8x32xf32>
    %32 = arith.addf %30, %31 : vector<8x32xf32>
    %33 = math.tanh %32 : vector<8x32xf32>
    %34 = arith.mulf %29, %33 : vector<8x32xf32>
    %35 = vector.broadcast %4 : vector<1x32xf32> to vector<8x32xf32>
    %36 = arith.mulf %34, %35 : vector<8x32xf32>
    %cst_10 = arith.constant dense<0.000000e+00> : vector<8xf32>
    %37 = vector.multi_reduction <add>, %36, %cst_10 [1] : vector<8x32xf32> to vector<8xf32>
    %38 = vector.shape_cast %37 : vector<8xf32> to vector<8x1xf32>
    %39 = vector.extract_strided_slice %8 {offsets = [8, 0], sizes = [8, 128], strides = [1, 1]} : vector<64x128xf32> to vector<8x128xf32>
    %40 = arith.truncf %34 : vector<8x32xf32> to vector<8x32xbf16>
    %cst_11 = arith.constant dense<0.000000e+00> : vector<8x128xf32>
    %41 = tpu.matmul %40, %2, %cst_11 {dimension_numbers = #tpu.dot_dimension_numbers<[1], [0], [0], [1], [0, 0, 1, 1], [], []>} : vector<8x32xbf16>, vector<32x128xbf16>, vector<8x128xf32> -> vector<8x128xf32>
    %42 = arith.addf %39, %41 : vector<8x128xf32>
    %cst_12 = arith.constant 5.000000e-01 : f32
    %43 = vector.broadcast %cst_12 : f32 to vector<8x128xf32>
    %44 = arith.mulf %43, %42 : vector<8x128xf32>
    %45 = arith.select %14, %42, %44 : vector<8x128xi1>, vector<8x128xf32>
    %46 = math.tanh %45 : vector<8x128xf32>
    %cst_13 = arith.constant 5.000000e-01 : f32
    %47 = vector.broadcast %cst_13 : f32 to vector<8x128xf32>
    %48 = arith.mulf %47, %46 : vector<8x128xf32>
    %cst_14 = arith.constant 5.000000e-01 : f32
    %49 = vector.broadcast %cst_14 : f32 to vector<8x128xf32>
    %50 = arith.addf %48, %49 : vector<8x128xf32>
    %51 = arith.select %14, %46, %50 : vector<8x128xi1>, vector<8x128xf32>
    %52 = vector.extract_strided_slice %51 {offsets = [0, 0], sizes = [8, 32], strides = [1, 1]} : vector<8x128xf32> to vector<8x32xf32>
    %53 = vector.extract_strided_slice %51 {offsets = [0, 32], sizes = [8, 32], strides = [1, 1]} : vector<8x128xf32> to vector<8x32xf32>
    %54 = vector.extract_strided_slice %51 {offsets = [0, 64], sizes = [8, 32], strides = [1, 1]} : vector<8x128xf32> to vector<8x32xf32>
    %55 = vector.extract_strided_slice %51 {offsets = [0, 96], sizes = [8, 32], strides = [1, 1]} : vector<8x128xf32> to vector<8x32xf32>
    %56 = arith.mulf %53, %32 : vector<8x32xf32>
    %57 = arith.mulf %52, %54 : vector<8x32xf32>
    %58 = arith.addf %56, %57 : vector<8x32xf32>
    %59 = math.tanh %58 : vector<8x32xf32>
    %60 = arith.mulf %55, %59 : vector<8x32xf32>
    %61 = vector.broadcast %4 : vector<1x32xf32> to vector<8x32xf32>
    %62 = arith.mulf %60, %61 : vector<8x32xf32>
    %cst_15 = arith.constant dense<0.000000e+00> : vector<8xf32>
    %63 = vector.multi_reduction <add>, %62, %cst_15 [1] : vector<8x32xf32> to vector<8xf32>
    %64 = vector.shape_cast %63 : vector<8xf32> to vector<8x1xf32>
    %65 = vector.extract_strided_slice %8 {offsets = [16, 0], sizes = [8, 128], strides = [1, 1]} : vector<64x128xf32> to vector<8x128xf32>
    %66 = arith.truncf %60 : vector<8x32xf32> to vector<8x32xbf16>
    %cst_16 = arith.constant dense<0.000000e+00> : vector<8x128xf32>
    %67 = tpu.matmul %66, %2, %cst_16 {dimension_numbers = #tpu.dot_dimension_numbers<[1], [0], [0], [1], [0, 0, 1, 1], [], []>} : vector<8x32xbf16>, vector<32x128xbf16>, vector<8x128xf32> -> vector<8x128xf32>
    %68 = arith.addf %65, %67 : vector<8x128xf32>
    %cst_17 = arith.constant 5.000000e-01 : f32
    %69 = vector.broadcast %cst_17 : f32 to vector<8x128xf32>
    %70 = arith.mulf %69, %68 : vector<8x128xf32>
    %71 = arith.select %14, %68, %70 : vector<8x128xi1>, vector<8x128xf32>
    %72 = math.tanh %71 : vector<8x128xf32>
    %cst_18 = arith.constant 5.000000e-01 : f32
    %73 = vector.broadcast %cst_18 : f32 to vector<8x128xf32>
    %74 = arith.mulf %73, %72 : vector<8x128xf32>
    %cst_19 = arith.constant 5.000000e-01 : f32
    %75 = vector.broadcast %cst_19 : f32 to vector<8x128xf32>
    %76 = arith.addf %74, %75 : vector<8x128xf32>
    %77 = arith.select %14, %72, %76 : vector<8x128xi1>, vector<8x128xf32>
    %78 = vector.extract_strided_slice %77 {offsets = [0, 0], sizes = [8, 32], strides = [1, 1]} : vector<8x128xf32> to vector<8x32xf32>
    %79 = vector.extract_strided_slice %77 {offsets = [0, 32], sizes = [8, 32], strides = [1, 1]} : vector<8x128xf32> to vector<8x32xf32>
    %80 = vector.extract_strided_slice %77 {offsets = [0, 64], sizes = [8, 32], strides = [1, 1]} : vector<8x128xf32> to vector<8x32xf32>
    %81 = vector.extract_strided_slice %77 {offsets = [0, 96], sizes = [8, 32], strides = [1, 1]} : vector<8x128xf32> to vector<8x32xf32>
    %82 = arith.mulf %79, %58 : vector<8x32xf32>
    %83 = arith.mulf %78, %80 : vector<8x32xf32>
    %84 = arith.addf %82, %83 : vector<8x32xf32>
    %85 = math.tanh %84 : vector<8x32xf32>
    %86 = arith.mulf %81, %85 : vector<8x32xf32>
    %87 = vector.broadcast %4 : vector<1x32xf32> to vector<8x32xf32>
    %88 = arith.mulf %86, %87 : vector<8x32xf32>
    %cst_20 = arith.constant dense<0.000000e+00> : vector<8xf32>
    %89 = vector.multi_reduction <add>, %88, %cst_20 [1] : vector<8x32xf32> to vector<8xf32>
    %90 = vector.shape_cast %89 : vector<8xf32> to vector<8x1xf32>
    %91 = vector.extract_strided_slice %8 {offsets = [24, 0], sizes = [8, 128], strides = [1, 1]} : vector<64x128xf32> to vector<8x128xf32>
    %92 = arith.truncf %86 : vector<8x32xf32> to vector<8x32xbf16>
    %cst_21 = arith.constant dense<0.000000e+00> : vector<8x128xf32>
    %93 = tpu.matmul %92, %2, %cst_21 {dimension_numbers = #tpu.dot_dimension_numbers<[1], [0], [0], [1], [0, 0, 1, 1], [], []>} : vector<8x32xbf16>, vector<32x128xbf16>, vector<8x128xf32> -> vector<8x128xf32>
    %94 = arith.addf %91, %93 : vector<8x128xf32>
    %cst_22 = arith.constant 5.000000e-01 : f32
    %95 = vector.broadcast %cst_22 : f32 to vector<8x128xf32>
    %96 = arith.mulf %95, %94 : vector<8x128xf32>
    %97 = arith.select %14, %94, %96 : vector<8x128xi1>, vector<8x128xf32>
    %98 = math.tanh %97 : vector<8x128xf32>
    %cst_23 = arith.constant 5.000000e-01 : f32
    %99 = vector.broadcast %cst_23 : f32 to vector<8x128xf32>
    %100 = arith.mulf %99, %98 : vector<8x128xf32>
    %cst_24 = arith.constant 5.000000e-01 : f32
    %101 = vector.broadcast %cst_24 : f32 to vector<8x128xf32>
    %102 = arith.addf %100, %101 : vector<8x128xf32>
    %103 = arith.select %14, %98, %102 : vector<8x128xi1>, vector<8x128xf32>
    %104 = vector.extract_strided_slice %103 {offsets = [0, 0], sizes = [8, 32], strides = [1, 1]} : vector<8x128xf32> to vector<8x32xf32>
    %105 = vector.extract_strided_slice %103 {offsets = [0, 32], sizes = [8, 32], strides = [1, 1]} : vector<8x128xf32> to vector<8x32xf32>
    %106 = vector.extract_strided_slice %103 {offsets = [0, 64], sizes = [8, 32], strides = [1, 1]} : vector<8x128xf32> to vector<8x32xf32>
    %107 = vector.extract_strided_slice %103 {offsets = [0, 96], sizes = [8, 32], strides = [1, 1]} : vector<8x128xf32> to vector<8x32xf32>
    %108 = arith.mulf %105, %84 : vector<8x32xf32>
    %109 = arith.mulf %104, %106 : vector<8x32xf32>
    %110 = arith.addf %108, %109 : vector<8x32xf32>
    %111 = math.tanh %110 : vector<8x32xf32>
    %112 = arith.mulf %107, %111 : vector<8x32xf32>
    %113 = vector.broadcast %4 : vector<1x32xf32> to vector<8x32xf32>
    %114 = arith.mulf %112, %113 : vector<8x32xf32>
    %cst_25 = arith.constant dense<0.000000e+00> : vector<8xf32>
    %115 = vector.multi_reduction <add>, %114, %cst_25 [1] : vector<8x32xf32> to vector<8xf32>
    %116 = vector.shape_cast %115 : vector<8xf32> to vector<8x1xf32>
    %117 = vector.extract_strided_slice %8 {offsets = [32, 0], sizes = [8, 128], strides = [1, 1]} : vector<64x128xf32> to vector<8x128xf32>
    %118 = arith.truncf %112 : vector<8x32xf32> to vector<8x32xbf16>
    %cst_26 = arith.constant dense<0.000000e+00> : vector<8x128xf32>
    %119 = tpu.matmul %118, %2, %cst_26 {dimension_numbers = #tpu.dot_dimension_numbers<[1], [0], [0], [1], [0, 0, 1, 1], [], []>} : vector<8x32xbf16>, vector<32x128xbf16>, vector<8x128xf32> -> vector<8x128xf32>
    %120 = arith.addf %117, %119 : vector<8x128xf32>
    %cst_27 = arith.constant 5.000000e-01 : f32
    %121 = vector.broadcast %cst_27 : f32 to vector<8x128xf32>
    %122 = arith.mulf %121, %120 : vector<8x128xf32>
    %123 = arith.select %14, %120, %122 : vector<8x128xi1>, vector<8x128xf32>
    %124 = math.tanh %123 : vector<8x128xf32>
    %cst_28 = arith.constant 5.000000e-01 : f32
    %125 = vector.broadcast %cst_28 : f32 to vector<8x128xf32>
    %126 = arith.mulf %125, %124 : vector<8x128xf32>
    %cst_29 = arith.constant 5.000000e-01 : f32
    %127 = vector.broadcast %cst_29 : f32 to vector<8x128xf32>
    %128 = arith.addf %126, %127 : vector<8x128xf32>
    %129 = arith.select %14, %124, %128 : vector<8x128xi1>, vector<8x128xf32>
    %130 = vector.extract_strided_slice %129 {offsets = [0, 0], sizes = [8, 32], strides = [1, 1]} : vector<8x128xf32> to vector<8x32xf32>
    %131 = vector.extract_strided_slice %129 {offsets = [0, 32], sizes = [8, 32], strides = [1, 1]} : vector<8x128xf32> to vector<8x32xf32>
    %132 = vector.extract_strided_slice %129 {offsets = [0, 64], sizes = [8, 32], strides = [1, 1]} : vector<8x128xf32> to vector<8x32xf32>
    %133 = vector.extract_strided_slice %129 {offsets = [0, 96], sizes = [8, 32], strides = [1, 1]} : vector<8x128xf32> to vector<8x32xf32>
    %134 = arith.mulf %131, %110 : vector<8x32xf32>
    %135 = arith.mulf %130, %132 : vector<8x32xf32>
    %136 = arith.addf %134, %135 : vector<8x32xf32>
    %137 = math.tanh %136 : vector<8x32xf32>
    %138 = arith.mulf %133, %137 : vector<8x32xf32>
    %139 = vector.broadcast %4 : vector<1x32xf32> to vector<8x32xf32>
    %140 = arith.mulf %138, %139 : vector<8x32xf32>
    %cst_30 = arith.constant dense<0.000000e+00> : vector<8xf32>
    %141 = vector.multi_reduction <add>, %140, %cst_30 [1] : vector<8x32xf32> to vector<8xf32>
    %142 = vector.shape_cast %141 : vector<8xf32> to vector<8x1xf32>
    %143 = vector.extract_strided_slice %8 {offsets = [40, 0], sizes = [8, 128], strides = [1, 1]} : vector<64x128xf32> to vector<8x128xf32>
    %144 = arith.truncf %138 : vector<8x32xf32> to vector<8x32xbf16>
    %cst_31 = arith.constant dense<0.000000e+00> : vector<8x128xf32>
    %145 = tpu.matmul %144, %2, %cst_31 {dimension_numbers = #tpu.dot_dimension_numbers<[1], [0], [0], [1], [0, 0, 1, 1], [], []>} : vector<8x32xbf16>, vector<32x128xbf16>, vector<8x128xf32> -> vector<8x128xf32>
    %146 = arith.addf %143, %145 : vector<8x128xf32>
    %cst_32 = arith.constant 5.000000e-01 : f32
    %147 = vector.broadcast %cst_32 : f32 to vector<8x128xf32>
    %148 = arith.mulf %147, %146 : vector<8x128xf32>
    %149 = arith.select %14, %146, %148 : vector<8x128xi1>, vector<8x128xf32>
    %150 = math.tanh %149 : vector<8x128xf32>
    %cst_33 = arith.constant 5.000000e-01 : f32
    %151 = vector.broadcast %cst_33 : f32 to vector<8x128xf32>
    %152 = arith.mulf %151, %150 : vector<8x128xf32>
    %cst_34 = arith.constant 5.000000e-01 : f32
    %153 = vector.broadcast %cst_34 : f32 to vector<8x128xf32>
    %154 = arith.addf %152, %153 : vector<8x128xf32>
    %155 = arith.select %14, %150, %154 : vector<8x128xi1>, vector<8x128xf32>
    %156 = vector.extract_strided_slice %155 {offsets = [0, 0], sizes = [8, 32], strides = [1, 1]} : vector<8x128xf32> to vector<8x32xf32>
    %157 = vector.extract_strided_slice %155 {offsets = [0, 32], sizes = [8, 32], strides = [1, 1]} : vector<8x128xf32> to vector<8x32xf32>
    %158 = vector.extract_strided_slice %155 {offsets = [0, 64], sizes = [8, 32], strides = [1, 1]} : vector<8x128xf32> to vector<8x32xf32>
    %159 = vector.extract_strided_slice %155 {offsets = [0, 96], sizes = [8, 32], strides = [1, 1]} : vector<8x128xf32> to vector<8x32xf32>
    %160 = arith.mulf %157, %136 : vector<8x32xf32>
    %161 = arith.mulf %156, %158 : vector<8x32xf32>
    %162 = arith.addf %160, %161 : vector<8x32xf32>
    %163 = math.tanh %162 : vector<8x32xf32>
    %164 = arith.mulf %159, %163 : vector<8x32xf32>
    %165 = vector.broadcast %4 : vector<1x32xf32> to vector<8x32xf32>
    %166 = arith.mulf %164, %165 : vector<8x32xf32>
    %cst_35 = arith.constant dense<0.000000e+00> : vector<8xf32>
    %167 = vector.multi_reduction <add>, %166, %cst_35 [1] : vector<8x32xf32> to vector<8xf32>
    %168 = vector.shape_cast %167 : vector<8xf32> to vector<8x1xf32>
    %169 = vector.extract_strided_slice %8 {offsets = [48, 0], sizes = [8, 128], strides = [1, 1]} : vector<64x128xf32> to vector<8x128xf32>
    %170 = arith.truncf %164 : vector<8x32xf32> to vector<8x32xbf16>
    %cst_36 = arith.constant dense<0.000000e+00> : vector<8x128xf32>
    %171 = tpu.matmul %170, %2, %cst_36 {dimension_numbers = #tpu.dot_dimension_numbers<[1], [0], [0], [1], [0, 0, 1, 1], [], []>} : vector<8x32xbf16>, vector<32x128xbf16>, vector<8x128xf32> -> vector<8x128xf32>
    %172 = arith.addf %169, %171 : vector<8x128xf32>
    %cst_37 = arith.constant 5.000000e-01 : f32
    %173 = vector.broadcast %cst_37 : f32 to vector<8x128xf32>
    %174 = arith.mulf %173, %172 : vector<8x128xf32>
    %175 = arith.select %14, %172, %174 : vector<8x128xi1>, vector<8x128xf32>
    %176 = math.tanh %175 : vector<8x128xf32>
    %cst_38 = arith.constant 5.000000e-01 : f32
    %177 = vector.broadcast %cst_38 : f32 to vector<8x128xf32>
    %178 = arith.mulf %177, %176 : vector<8x128xf32>
    %cst_39 = arith.constant 5.000000e-01 : f32
    %179 = vector.broadcast %cst_39 : f32 to vector<8x128xf32>
    %180 = arith.addf %178, %179 : vector<8x128xf32>
    %181 = arith.select %14, %176, %180 : vector<8x128xi1>, vector<8x128xf32>
    %182 = vector.extract_strided_slice %181 {offsets = [0, 0], sizes = [8, 32], strides = [1, 1]} : vector<8x128xf32> to vector<8x32xf32>
    %183 = vector.extract_strided_slice %181 {offsets = [0, 32], sizes = [8, 32], strides = [1, 1]} : vector<8x128xf32> to vector<8x32xf32>
    %184 = vector.extract_strided_slice %181 {offsets = [0, 64], sizes = [8, 32], strides = [1, 1]} : vector<8x128xf32> to vector<8x32xf32>
    %185 = vector.extract_strided_slice %181 {offsets = [0, 96], sizes = [8, 32], strides = [1, 1]} : vector<8x128xf32> to vector<8x32xf32>
    %186 = arith.mulf %183, %162 : vector<8x32xf32>
    %187 = arith.mulf %182, %184 : vector<8x32xf32>
    %188 = arith.addf %186, %187 : vector<8x32xf32>
    %189 = math.tanh %188 : vector<8x32xf32>
    %190 = arith.mulf %185, %189 : vector<8x32xf32>
    %191 = vector.broadcast %4 : vector<1x32xf32> to vector<8x32xf32>
    %192 = arith.mulf %190, %191 : vector<8x32xf32>
    %cst_40 = arith.constant dense<0.000000e+00> : vector<8xf32>
    %193 = vector.multi_reduction <add>, %192, %cst_40 [1] : vector<8x32xf32> to vector<8xf32>
    %194 = vector.shape_cast %193 : vector<8xf32> to vector<8x1xf32>
    %195 = vector.extract_strided_slice %8 {offsets = [56, 0], sizes = [8, 128], strides = [1, 1]} : vector<64x128xf32> to vector<8x128xf32>
    %196 = arith.truncf %190 : vector<8x32xf32> to vector<8x32xbf16>
    %cst_41 = arith.constant dense<0.000000e+00> : vector<8x128xf32>
    %197 = tpu.matmul %196, %2, %cst_41 {dimension_numbers = #tpu.dot_dimension_numbers<[1], [0], [0], [1], [0, 0, 1, 1], [], []>} : vector<8x32xbf16>, vector<32x128xbf16>, vector<8x128xf32> -> vector<8x128xf32>
    %198 = arith.addf %195, %197 : vector<8x128xf32>
    %cst_42 = arith.constant 5.000000e-01 : f32
    %199 = vector.broadcast %cst_42 : f32 to vector<8x128xf32>
    %200 = arith.mulf %199, %198 : vector<8x128xf32>
    %201 = arith.select %14, %198, %200 : vector<8x128xi1>, vector<8x128xf32>
    %202 = math.tanh %201 : vector<8x128xf32>
    %cst_43 = arith.constant 5.000000e-01 : f32
    %203 = vector.broadcast %cst_43 : f32 to vector<8x128xf32>
    %204 = arith.mulf %203, %202 : vector<8x128xf32>
    %cst_44 = arith.constant 5.000000e-01 : f32
    %205 = vector.broadcast %cst_44 : f32 to vector<8x128xf32>
    %206 = arith.addf %204, %205 : vector<8x128xf32>
    %207 = arith.select %14, %202, %206 : vector<8x128xi1>, vector<8x128xf32>
    %208 = vector.extract_strided_slice %207 {offsets = [0, 0], sizes = [8, 32], strides = [1, 1]} : vector<8x128xf32> to vector<8x32xf32>
    %209 = vector.extract_strided_slice %207 {offsets = [0, 32], sizes = [8, 32], strides = [1, 1]} : vector<8x128xf32> to vector<8x32xf32>
    %210 = vector.extract_strided_slice %207 {offsets = [0, 64], sizes = [8, 32], strides = [1, 1]} : vector<8x128xf32> to vector<8x32xf32>
    %211 = vector.extract_strided_slice %207 {offsets = [0, 96], sizes = [8, 32], strides = [1, 1]} : vector<8x128xf32> to vector<8x32xf32>
    %212 = arith.mulf %209, %188 : vector<8x32xf32>
    %213 = arith.mulf %208, %210 : vector<8x32xf32>
    %214 = arith.addf %212, %213 : vector<8x32xf32>
    %215 = math.tanh %214 : vector<8x32xf32>
    %216 = arith.mulf %211, %215 : vector<8x32xf32>
    %217 = vector.broadcast %4 : vector<1x32xf32> to vector<8x32xf32>
    %218 = arith.mulf %216, %217 : vector<8x32xf32>
    %cst_45 = arith.constant dense<0.000000e+00> : vector<8xf32>
    %219 = vector.multi_reduction <add>, %218, %cst_45 [1] : vector<8x32xf32> to vector<8xf32>
    %220 = vector.shape_cast %219 : vector<8xf32> to vector<8x1xf32>
    %221 = arith.maximumf %38, %64 : vector<8x1xf32>
    %222 = arith.maximumf %221, %90 : vector<8x1xf32>
    %223 = arith.maximumf %222, %116 : vector<8x1xf32>
    %224 = arith.maximumf %223, %142 : vector<8x1xf32>
    %225 = arith.maximumf %224, %168 : vector<8x1xf32>
    %226 = arith.maximumf %225, %194 : vector<8x1xf32>
    %227 = arith.maximumf %226, %220 : vector<8x1xf32>
    %228 = arith.subf %38, %227 : vector<8x1xf32>
    %229 = math.exp %228 : vector<8x1xf32>
    %230 = arith.subf %64, %227 : vector<8x1xf32>
    %231 = math.exp %230 : vector<8x1xf32>
    %232 = arith.subf %90, %227 : vector<8x1xf32>
    %233 = math.exp %232 : vector<8x1xf32>
    %234 = arith.subf %116, %227 : vector<8x1xf32>
    %235 = math.exp %234 : vector<8x1xf32>
    %236 = arith.subf %142, %227 : vector<8x1xf32>
    %237 = math.exp %236 : vector<8x1xf32>
    %238 = arith.subf %168, %227 : vector<8x1xf32>
    %239 = math.exp %238 : vector<8x1xf32>
    %240 = arith.subf %194, %227 : vector<8x1xf32>
    %241 = math.exp %240 : vector<8x1xf32>
    %242 = arith.subf %220, %227 : vector<8x1xf32>
    %243 = math.exp %242 : vector<8x1xf32>
    %244 = vector.broadcast %229 : vector<8x1xf32> to vector<8x32xf32>
    %245 = arith.mulf %244, %34 : vector<8x32xf32>
    %246 = arith.addf %229, %231 : vector<8x1xf32>
    %247 = vector.broadcast %231 : vector<8x1xf32> to vector<8x32xf32>
    %248 = arith.mulf %247, %60 : vector<8x32xf32>
    %249 = arith.addf %245, %248 : vector<8x32xf32>
    %250 = arith.addf %246, %233 : vector<8x1xf32>
    %251 = vector.broadcast %233 : vector<8x1xf32> to vector<8x32xf32>
    %252 = arith.mulf %251, %86 : vector<8x32xf32>
    %253 = arith.addf %249, %252 : vector<8x32xf32>
    %254 = arith.addf %250, %235 : vector<8x1xf32>
    %255 = vector.broadcast %235 : vector<8x1xf32> to vector<8x32xf32>
    %256 = arith.mulf %255, %112 : vector<8x32xf32>
    %257 = arith.addf %253, %256 : vector<8x32xf32>
    %258 = arith.addf %254, %237 : vector<8x1xf32>
    %259 = vector.broadcast %237 : vector<8x1xf32> to vector<8x32xf32>
    %260 = arith.mulf %259, %138 : vector<8x32xf32>
    %261 = arith.addf %257, %260 : vector<8x32xf32>
    %262 = arith.addf %258, %239 : vector<8x1xf32>
    %263 = vector.broadcast %239 : vector<8x1xf32> to vector<8x32xf32>
    %264 = arith.mulf %263, %164 : vector<8x32xf32>
    %265 = arith.addf %261, %264 : vector<8x32xf32>
    %266 = arith.addf %262, %241 : vector<8x1xf32>
    %267 = vector.broadcast %241 : vector<8x1xf32> to vector<8x32xf32>
    %268 = arith.mulf %267, %190 : vector<8x32xf32>
    %269 = arith.addf %265, %268 : vector<8x32xf32>
    %270 = arith.addf %266, %243 : vector<8x1xf32>
    %271 = vector.broadcast %243 : vector<8x1xf32> to vector<8x32xf32>
    %272 = arith.mulf %271, %216 : vector<8x32xf32>
    %273 = arith.addf %269, %272 : vector<8x32xf32>
    %274 = tpu.reciprocal %270 {approx = true} : vector<8x1xf32> -> vector<8x1xf32>
    %275 = vector.broadcast %274 : vector<8x1xf32> to vector<8x32xf32>
    %276 = arith.mulf %273, %275 : vector<8x32xf32>
    %c0_46 = arith.constant 0 : index
    %c0_47 = arith.constant 0 : index
    %277 = vector.load %arg2[%c0_46, %c0_47] : memref<8x32xf32, #tpu.memory_space<vmem>>, vector<8x32xf32>
    tpu.vector_store %arg2[%c0_46, %c0_47], %276 {strides = array<i32>} : memref<8x32xf32, #tpu.memory_space<vmem>>, vector<8x32xf32>,
    return
  }
}

</mosaic_0001>

<llo_original>
// kernel: tpu_custom_call.1
$region0: #{tpu_custom_call.1}
  #allocation0 [shape = 'u32[]', space=smem, size = 0x4, offset = 0x4, fixed_abs, tag = 'smem constant byte address 0x4 - core index']
  #allocation1 [shape = 'u32[72,128]{1,0:T(1,128)}', space=vmem, size = 0x9000, scoped, tag = 'internal scratch']
  %s0 = inlined_call_operand.vmem [shape: f32[64,8], index: 0, kind: input, shape index: {}]
  %s1 = inlined_call_operand.vmem [shape: f32[48,128], index: 1, kind: input, shape index: {}]
  %s2 = inlined_call_operand.hbm [shape: f32[8,32], index: 2, kind: output, shape index: {}]
  %s3 = sld [smem:[#allocation0]]
  $region18: #{tpu_custom_call.1} parent=0
    _
  %s5 = ssub.s32 1, %s3
  %s6 = scalar_select 0, %s5, %s3
  $region1: #{tpu_custom_call.1} parent=0
    #allocation2 [shape = 'u8[4096]{0}', space=vmem, size = 0x1000, scoped, tag = 'output window, operand 0, single buffered']
    #allocation3 [shape = 's32[1]{0}', space=sflag, size = 0x4, scoped, tag = 'scoped memory for tpu_custom_call.1']
    %7 = vsyncpa [#allocation3], 0
    // Predicated region
    $region2: #{tpu_custom_call.1} parent=1 // pred_check
      _
    $region3: #{tpu_custom_call.1} parent=1 // pred_check_branch
      %9 = sbr.rel (0) target = $region5
    $region4: #{tpu_custom_call.1} parent=1 // pred_region
      _
    $region5: #{tpu_custom_call.1} parent=1 // pred_fallthru
      _
    // Predicated region
    $region6: #{tpu_custom_call.1} parent=1 // pred_check
      _
    $region7: #{tpu_custom_call.1} parent=1 // pred_check_branch
      %11 = sbr.rel (0) target = $region9
    $region8: #{tpu_custom_call.1} parent=1 // pred_region
      _
    $region9: #{tpu_custom_call.1} parent=1 // pred_fallthru
      _
    %v13 = vld [vmem:[%s1] sm:$0xff]
    %v14 = vld [vmem:[%s1 + $0x8] sm:$0xff]
    %v15 = vld [vmem:[%s1 + $0x10] sm:$0xff]
    %v16 = vld [vmem:[%s1 + $0x18] sm:$0xff]
    %v17 = vld [vmem:[%s1 + $0x20] sm:$0xff]
    %v18 = vpack.c.bf16 %v15, %v14
    %v19 = vpack.c.bf16 %v17, %v16
    %v20 = vld [vmem:[%s1 + $0x28] sm:$0x1]
    %v21 = vld [vmem:[%s1 + $0x29] sm:$0x1]
    %v22 = vld [vmem:[%s0] sm:$0xff]
    %v23 = vld [vmem:[%s0 + $0x8] sm:$0xff]
    %v24 = vld [vmem:[%s0 + $0x10] sm:$0xff]
    %v25 = vld [vmem:[%s0 + $0x18] sm:$0xff]
    %v26 = vld [vmem:[%s0 + $0x20] sm:$0xff]
    %v27 = vld [vmem:[%s0 + $0x28] sm:$0xff]
    %v28 = vld [vmem:[%s0 + $0x30] sm:$0xff]
    %v29 = vld [vmem:[%s0 + $0x38] sm:$0xff]
    %v30 = vperm.slane %v20, 0
    %vm31 = vcmask 64512
    %v33 = vsel %vm31, %v22, 0
    %v36 = vsel %vm31, %v23, 0
    %v39 = vsel %vm31, %v24, 0
    %v42 = vsel %vm31, %v25, 0
    %v45 = vsel %vm31, %v26, 0
    %v48 = vsel %vm31, %v27, 0
    %v51 = vsel %vm31, %v28, 0
    %v54 = vsel %vm31, %v29, 0
    %56 = vmatpush.msra.mxu0 0.0
    %57 = vmatpush.msra.mxu0 0.0
    %58 = vmatpush.msra.mxu0 0.0
    %59 = vmatpush.msra.mxu0 0.0
    %60 = vmatpush.msra.mxu0 0.0
    %61 = vmatpush.msra.mxu0 0.0
    %62 = vmatpush.msra.mxu0 0.0
    %63 = vmatpush.msra.mxu0 0.0
    %64 = vmatpush.msra.mxu0 0.0
    %65 = vmatpush.msra.mxu0 0.0
    %66 = vmatpush.msra.mxu0 0.0
    %67 = vmatpush.msra.mxu0 0.0
    %68 = vmatpush.msra.mxu0 0.0
    %69 = vmatpush.msra.mxu0 0.0
    %70 = vmatpush.msra.mxu0 0.0
    %71 = vmatpush.msra.mxu0 %v13
    %72 = vmatmul.f32.gmra.mxu0 %v33
    %v73 = vpop.f32.mrf.mxu0
    %v74 = vadd.f32 %v30, %v73
    %75 = vmatmul.f32.gmra.mxu0 %v36
    %v76 = vpop.f32.mrf.mxu0
    %v77 = vadd.f32 %v30, %v76
    %78 = vmatmul.f32.gmra.mxu0 %v39
    %v79 = vpop.f32.mrf.mxu0
    %v80 = vadd.f32 %v30, %v79
    %81 = vmatmul.f32.gmra.mxu0 %v42
    %v82 = vpop.f32.mrf.mxu0
    %v83 = vadd.f32 %v30, %v82
    %84 = vmatmul.f32.gmra.mxu0 %v45
    %v85 = vpop.f32.mrf.mxu0
    %v86 = vadd.f32 %v30, %v85
    %87 = vmatmul.f32.gmra.mxu0 %v48
    %v88 = vpop.f32.mrf.mxu0
    %v89 = vadd.f32 %v30, %v88
    %90 = vmatmul.f32.gmra.mxu0 %v51
    %v91 = vpop.f32.mrf.mxu0
    %v92 = vadd.f32 %v30, %v91
    %93 = vmatmul.f32.gmra.mxu0 %v54
    %v94 = vpop.f32.mrf.mxu0
    %v95 = vadd.f32 %v30, %v94
    %96 = vdwg.mxu0
    %v97 = vlaneseq
    %v98 = vand.u32 %v97, 127
    %vm99 = vcmp.ge.s32.totalorder %v98, 64
    %vm100 = vcmp.lt.s32.totalorder %v98, 96
    %vm101 = vmand %vm99, %vm100
    %v102 = vmul.f32 %v74, 0.5
    %v103 = vsel %vm101, %v74, %v102
    %v104 = vtanh.pop %v103
    %v105 = vmul.f32 %v104, 0.5
    %v106 = vadd.f32 %v105, 0.5
    %v107 = vsel %vm101, %v104, %v106
    %v108 = vmul.f32 %v107, 0.0
    %110 = vrot.lane.b32.xlu0 %v107, 64
    %v111 = vpop.permute.xlu0 %110
    %v113 = vmul.f32 %v107, %v111
    %115 = vrot.lane.b32.xlu0 %v113, 32
    %v116 = vpop.permute.xlu0 %115
    %v118 = vadd.f32 %v108, %v116
    %v119 = vtanh.pop %v118
    %121 = vrot.lane.b32.xlu0 %v119, 64
    %v122 = vpop.permute.xlu0 %121
    %v124 = vmul.f32 %v107, %v122
    %v125 = vperm.slane %v21, 0
    %127 = vrot.lane.b32.xlu0 %v125, 96
    %v128 = vpop.permute.xlu0 %127
    %v130 = vmul.f32 %v124, %v128
    %132 = vrot.lane.b32.xlu0 %v130, 32
    %v133 = vpop.permute.xlu0 %132
    %vm135 = vcmask 261120
    %v136 = vsel %vm135, %v133, 0.0
    %137 = vadd.xlane.f32.xlu0 %v136
    %v138 = vpop.xlane.xlu0 %137
    %v139 = vpack.c.bf16 %v124, %v124
    %141 = vrot.lane.b32.xlu0 %v139, 32
    %v142 = vpop.permute.xlu0 %141
    %v144 = vsel %vm135, %v142, 0
    %146 = vmatpush.bf16.msra.mxu0 0
    %147 = vmatpush.bf16.msra.mxu0 0
    %148 = vmatpush.bf16.msra.mxu0 0
    %149 = vmatpush.bf16.msra.mxu0 0
    %150 = vmatpush.bf16.msra.mxu0 0
    %151 = vmatpush.bf16.msra.mxu0 0
    %152 = vmatpush.bf16.msra.mxu0 %v19
    %153 = vmatpush.bf16.msra.mxu0 %v18
    %154 = vmatmul.bf16.gmra.mxu0 %v144
    %v155 = vpop.f32.mrf.mxu0
    %v156 = vadd.f32 0.0, %v155
    %v157 = vpop.f32.mrf.mxu0
    %158 = vdwg.mxu0
    %v159 = vadd.f32 %v77, %v156
    %v160 = vmul.f32 %v159, 0.5
    %v161 = vsel %vm101, %v159, %v160
    %v162 = vtanh.pop %v161
    %v163 = vmul.f32 %v162, 0.5
    %v164 = vadd.f32 %v163, 0.5
    %v165 = vsel %vm101, %v162, %v164
    %v166 = vmul.f32 %v165, %v118
    %168 = vrot.lane.b32.xlu0 %v165, 64
    %v169 = vpop.permute.xlu0 %168
    %v171 = vmul.f32 %v165, %v169
    %173 = vrot.lane.b32.xlu0 %v171, 32
    %v174 = vpop.permute.xlu0 %173
    %v176 = vadd.f32 %v166, %v174
    %v177 = vtanh.pop %v176
    %179 = vrot.lane.b32.xlu0 %v177, 64
    %v180 = vpop.permute.xlu0 %179
    %v182 = vmul.f32 %v165, %v180
    %v183 = vmul.f32 %v182, %v128
    %185 = vrot.lane.b32.xlu0 %v183, 32
    %v186 = vpop.permute.xlu0 %185
    %v188 = vsel %vm135, %v186, 0.0
    %189 = vadd.xlane.f32.xlu0 %v188
    %v190 = vpop.xlane.xlu0 %189
    %v191 = vpack.c.bf16 %v182, %v182
    %193 = vrot.lane.b32.xlu0 %v191, 32
    %v194 = vpop.permute.xlu0 %193
    %v196 = vsel %vm135, %v194, 0
    %198 = vmatpush.bf16.msra.mxu0 0
    %199 = vmatpush.bf16.msra.mxu0 0
    %200 = vmatpush.bf16.msra.mxu0 0
    %201 = vmatpush.bf16.msra.mxu0 0
    %202 = vmatpush.bf16.msra.mxu0 0
    %203 = vmatpush.bf16.msra.mxu0 0
    %204 = vmatpush.bf16.msra.mxu0 %v19
    %205 = vmatpush.bf16.msra.mxu0 %v18
    %206 = vmatmul.bf16.gmra.mxu0 %v196
    %v207 = vpop.f32.mrf.mxu0
    %v208 = vadd.f32 0.0, %v207
    %v209 = vpop.f32.mrf.mxu0
    %210 = vdwg.mxu0
    %v211 = vadd.f32 %v80, %v208
    %v212 = vmul.f32 %v211, 0.5
    %v213 = vsel %vm101, %v211, %v212
    %v214 = vtanh.pop %v213
    %v215 = vmul.f32 %v214, 0.5
    %v216 = vadd.f32 %v215, 0.5
    %v217 = vsel %vm101, %v214, %v216
    %v218 = vmul.f32 %v217, %v176
    %220 = vrot.lane.b32.xlu0 %v217, 64
    %v221 = vpop.permute.xlu0 %220
    %v223 = vmul.f32 %v217, %v221
    %225 = vrot.lane.b32.xlu0 %v223, 32
    %v226 = vpop.permute.xlu0 %225
    %v228 = vadd.f32 %v218, %v226
    %v229 = vtanh.pop %v228
    %231 = vrot.lane.b32.xlu0 %v229, 64
    %v232 = vpop.permute.xlu0 %231
    %v234 = vmul.f32 %v217, %v232
    %v235 = vmul.f32 %v234, %v128
    %237 = vrot.lane.b32.xlu0 %v235, 32
    %v238 = vpop.permute.xlu0 %237
    %v240 = vsel %vm135, %v238, 0.0
    %241 = vadd.xlane.f32.xlu0 %v240
    %v242 = vpop.xlane.xlu0 %241
    %v243 = vpack.c.bf16 %v234, %v234
    %245 = vrot.lane.b32.xlu0 %v243, 32
    %v246 = vpop.permute.xlu0 %245
    %v248 = vsel %vm135, %v246, 0
    %250 = vmatpush.bf16.msra.mxu0 0
    %251 = vmatpush.bf16.msra.mxu0 0
    %252 = vmatpush.bf16.msra.mxu0 0
    %253 = vmatpush.bf16.msra.mxu0 0
    %254 = vmatpush.bf16.msra.mxu0 0
    %255 = vmatpush.bf16.msra.mxu0 0
    %256 = vmatpush.bf16.msra.mxu0 %v19
    %257 = vmatpush.bf16.msra.mxu0 %v18
    %258 = vmatmul.bf16.gmra.mxu0 %v248
    %v259 = vpop.f32.mrf.mxu0
    %v260 = vadd.f32 0.0, %v259
    %v261 = vpop.f32.mrf.mxu0
    %262 = vdwg.mxu0
    %v263 = vadd.f32 %v83, %v260
    %v264 = vmul.f32 %v263, 0.5
    %v265 = vsel %vm101, %v263, %v264
    %v266 = vtanh.pop %v265
    %v267 = vmul.f32 %v266, 0.5
    %v268 = vadd.f32 %v267, 0.5
    %v269 = vsel %vm101, %v266, %v268
    %v270 = vmul.f32 %v269, %v228
    %272 = vrot.lane.b32.xlu0 %v269, 64
    %v273 = vpop.permute.xlu0 %272
    %v275 = vmul.f32 %v269, %v273
    %277 = vrot.lane.b32.xlu0 %v275, 32
    %v278 = vpop.permute.xlu0 %277
    %v280 = vadd.f32 %v270, %v278
    %v281 = vtanh.pop %v280
    %283 = vrot.lane.b32.xlu0 %v281, 64
    %v284 = vpop.permute.xlu0 %283
    %v286 = vmul.f32 %v269, %v284
    %v287 = vmul.f32 %v286, %v128
    %289 = vrot.lane.b32.xlu0 %v287, 32
    %v290 = vpop.permute.xlu0 %289
    %v292 = vsel %vm135, %v290, 0.0
    %293 = vadd.xlane.f32.xlu0 %v292
    %v294 = vpop.xlane.xlu0 %293
    %v295 = vpack.c.bf16 %v286, %v286
    %297 = vrot.lane.b32.xlu0 %v295, 32
    %v298 = vpop.permute.xlu0 %297
    %v300 = vsel %vm135, %v298, 0
    %302 = vmatpush.bf16.msra.mxu0 0
    %303 = vmatpush.bf16.msra.mxu0 0
    %304 = vmatpush.bf16.msra.mxu0 0
    %305 = vmatpush.bf16.msra.mxu0 0
    %306 = vmatpush.bf16.msra.mxu0 0
    %307 = vmatpush.bf16.msra.mxu0 0
    %308 = vmatpush.bf16.msra.mxu0 %v19
    %309 = vmatpush.bf16.msra.mxu0 %v18
    %310 = vmatmul.bf16.gmra.mxu0 %v300
    %v311 = vpop.f32.mrf.mxu0
    %v312 = vadd.f32 0.0, %v311
    %v313 = vpop.f32.mrf.mxu0
    %314 = vdwg.mxu0
    %v315 = vadd.f32 %v86, %v312
    %v316 = vmul.f32 %v315, 0.5
    %v317 = vsel %vm101, %v315, %v316
    %v318 = vtanh.pop %v317
    %v319 = vmul.f32 %v318, 0.5
    %v320 = vadd.f32 %v319, 0.5
    %v321 = vsel %vm101, %v318, %v320
    %v322 = vmul.f32 %v321, %v280
    %324 = vrot.lane.b32.xlu0 %v321, 64
    %v325 = vpop.permute.xlu0 %324
    %v327 = vmul.f32 %v321, %v325
    %329 = vrot.lane.b32.xlu0 %v327, 32
    %v330 = vpop.permute.xlu0 %329
    %v332 = vadd.f32 %v322, %v330
    %v333 = vtanh.pop %v332
    %335 = vrot.lane.b32.xlu0 %v333, 64
    %v336 = vpop.permute.xlu0 %335
    %v338 = vmul.f32 %v321, %v336
    %v339 = vmul.f32 %v338, %v128
    %341 = vrot.lane.b32.xlu0 %v339, 32
    %v342 = vpop.permute.xlu0 %341
    %v344 = vsel %vm135, %v342, 0.0
    %345 = vadd.xlane.f32.xlu0 %v344
    %v346 = vpop.xlane.xlu0 %345
    %v347 = vpack.c.bf16 %v338, %v338
    %349 = vrot.lane.b32.xlu0 %v347, 32
    %v350 = vpop.permute.xlu0 %349
    %v352 = vsel %vm135, %v350, 0
    %354 = vmatpush.bf16.msra.mxu0 0
    %355 = vmatpush.bf16.msra.mxu0 0
    %356 = vmatpush.bf16.msra.mxu0 0
    %357 = vmatpush.bf16.msra.mxu0 0
    %358 = vmatpush.bf16.msra.mxu0 0
    %359 = vmatpush.bf16.msra.mxu0 0
    %360 = vmatpush.bf16.msra.mxu0 %v19
    %361 = vmatpush.bf16.msra.mxu0 %v18
    %362 = vmatmul.bf16.gmra.mxu0 %v352
    %v363 = vpop.f32.mrf.mxu0
    %v364 = vadd.f32 0.0, %v363
    %v365 = vpop.f32.mrf.mxu0
    %366 = vdwg.mxu0
    %v367 = vadd.f32 %v89, %v364
    %v368 = vmul.f32 %v367, 0.5
    %v369 = vsel %vm101, %v367, %v368
    %v370 = vtanh.pop %v369
    %v371 = vmul.f32 %v370, 0.5
    %v372 = vadd.f32 %v371, 0.5
    %v373 = vsel %vm101, %v370, %v372
    %v374 = vmul.f32 %v373, %v332
    %376 = vrot.lane.b32.xlu0 %v373, 64
    %v377 = vpop.permute.xlu0 %376
    %v379 = vmul.f32 %v373, %v377
    %381 = vrot.lane.b32.xlu0 %v379, 32
    %v382 = vpop.permute.xlu0 %381
    %v384 = vadd.f32 %v374, %v382
    %v385 = vtanh.pop %v384
    %387 = vrot.lane.b32.xlu0 %v385, 64
    %v388 = vpop.permute.xlu0 %387
    %v390 = vmul.f32 %v373, %v388
    %v391 = vmul.f32 %v390, %v128
    %393 = vrot.lane.b32.xlu0 %v391, 32
    %v394 = vpop.permute.xlu0 %393
    %v396 = vsel %vm135, %v394, 0.0
    %397 = vadd.xlane.f32.xlu0 %v396
    %v398 = vpop.xlane.xlu0 %397
    %v399 = vpack.c.bf16 %v390, %v390
    %401 = vrot.lane.b32.xlu0 %v399, 32
    %v402 = vpop.permute.xlu0 %401
    %v404 = vsel %vm135, %v402, 0
    %406 = vmatpush.bf16.msra.mxu0 0
    %407 = vmatpush.bf16.msra.mxu0 0
    %408 = vmatpush.bf16.msra.mxu0 0
    %409 = vmatpush.bf16.msra.mxu0 0
    %410 = vmatpush.bf16.msra.mxu0 0
    %411 = vmatpush.bf16.msra.mxu0 0
    %412 = vmatpush.bf16.msra.mxu0 %v19
    %413 = vmatpush.bf16.msra.mxu0 %v18
    %414 = vmatmul.bf16.gmra.mxu0 %v404
    %v415 = vpop.f32.mrf.mxu0
    %v416 = vadd.f32 0.0, %v415
    %v417 = vpop.f32.mrf.mxu0
    %418 = vdwg.mxu0
    %v419 = vadd.f32 %v92, %v416
    %v420 = vmul.f32 %v419, 0.5
    %v421 = vsel %vm101, %v419, %v420
    %v422 = vtanh.pop %v421
    %v423 = vmul.f32 %v422, 0.5
    %v424 = vadd.f32 %v423, 0.5
    %v425 = vsel %vm101, %v422, %v424
    %v426 = vmul.f32 %v425, %v384
    %428 = vrot.lane.b32.xlu0 %v425, 64
    %v429 = vpop.permute.xlu0 %428
    %v431 = vmul.f32 %v425, %v429
    %433 = vrot.lane.b32.xlu0 %v431, 32
    %v434 = vpop.permute.xlu0 %433
    %v436 = vadd.f32 %v426, %v434
    %v437 = vtanh.pop %v436
    %439 = vrot.lane.b32.xlu0 %v437, 64
    %v440 = vpop.permute.xlu0 %439
    %v442 = vmul.f32 %v425, %v440
    %v443 = vmul.f32 %v442, %v128
    %445 = vrot.lane.b32.xlu0 %v443, 32
    %v446 = vpop.permute.xlu0 %445
    %v448 = vsel %vm135, %v446, 0.0
    %449 = vadd.xlane.f32.xlu0 %v448
    %v450 = vpop.xlane.xlu0 %449
    %v451 = vpack.c.bf16 %v442, %v442
    %453 = vrot.lane.b32.xlu0 %v451, 32
    %v454 = vpop.permute.xlu0 %453
    %v456 = vsel %vm135, %v454, 0
    %458 = vmatpush.bf16.msra.mxu0 0
    %459 = vmatpush.bf16.msra.mxu0 0
    %460 = vmatpush.bf16.msra.mxu0 0
    %461 = vmatpush.bf16.msra.mxu0 0
    %462 = vmatpush.bf16.msra.mxu0 0
    %463 = vmatpush.bf16.msra.mxu0 0
    %464 = vmatpush.bf16.msra.mxu0 %v19
    %465 = vmatpush.bf16.msra.mxu0 %v18
    %466 = vmatmul.bf16.gmra.mxu0 %v456
    %v467 = vpop.f32.mrf.mxu0
    %v468 = vadd.f32 0.0, %v467
    %v469 = vpop.f32.mrf.mxu0
    %470 = vdwg.mxu0
    %v471 = vadd.f32 %v95, %v468
    %v472 = vmul.f32 %v471, 0.5
    %v473 = vsel %vm101, %v471, %v472
    %v474 = vtanh.pop %v473
    %v475 = vmul.f32 %v474, 0.5
    %v476 = vadd.f32 %v475, 0.5
    %v477 = vsel %vm101, %v474, %v476
    %v478 = vmul.f32 %v477, %v436
    %480 = vrot.lane.b32.xlu0 %v477, 64
    %v481 = vpop.permute.xlu0 %480
    %v483 = vmul.f32 %v477, %v481
    %485 = vrot.lane.b32.xlu0 %v483, 32
    %v486 = vpop.permute.xlu0 %485
    %v488 = vadd.f32 %v478, %v486
    %v489 = vtanh.pop %v488
    %491 = vrot.lane.b32.xlu0 %v489, 64
    %v492 = vpop.permute.xlu0 %491
    %v494 = vmul.f32 %v477, %v492
    %v495 = vmul.f32 %v494, %v128
    %497 = vrot.lane.b32.xlu0 %v495, 32
    %v498 = vpop.permute.xlu0 %497
    %v500 = vsel %vm135, %v498, 0.0
    %501 = vadd.xlane.f32.xlu0 %v500
    %v502 = vpop.xlane.xlu0 %501
    %v503 = vmax.f32 %v138, %v190
    %v504 = vmax.f32 %v503, %v242
    %v505 = vmax.f32 %v504, %v294
    %v506 = vmax.f32 %v505, %v346
    %v507 = vmax.f32 %v506, %v398
    %v508 = vmax.f32 %v507, %v450
    %v509 = vmax.f32 %v508, %v502
    %v510 = vsub.f32 %v138, %v509
    %v511 = vmul.f32 %v510, 1.442695
    %v512 = vpow.pop %v511
    %v513 = vsub.f32 %v190, %v509
    %v514 = vmul.f32 %v513, 1.442695
    %v515 = vpow.pop %v514
    %v516 = vsub.f32 %v242, %v509
    %v517 = vmul.f32 %v516, 1.442695
    %v518 = vpow.pop %v517
    %v519 = vsub.f32 %v294, %v509
    %v520 = vmul.f32 %v519, 1.442695
    %v521 = vpow.pop %v520
    %v522 = vsub.f32 %v346, %v509
    %v523 = vmul.f32 %v522, 1.442695
    %v524 = vpow.pop %v523
    %v525 = vsub.f32 %v398, %v509
    %v526 = vmul.f32 %v525, 1.442695
    %v527 = vpow.pop %v526
    %v528 = vsub.f32 %v450, %v509
    %v529 = vmul.f32 %v528, 1.442695
    %v530 = vpow.pop %v529
    %v531 = vsub.f32 %v502, %v509
    %v532 = vmul.f32 %v531, 1.442695
    %v533 = vpow.pop %v532
    %v534 = vmul.f32 %v512, %v124
    %v535 = vadd.f32 %v512, %v515
    %v536 = vmul.f32 %v515, %v182
    %v537 = vadd.f32 %v534, %v536
    %v538 = vadd.f32 %v535, %v518
    %v539 = vmul.f32 %v518, %v234
    %v540 = vadd.f32 %v537, %v539
    %v541 = vadd.f32 %v538, %v521
    %v542 = vmul.f32 %v521, %v286
    %v543 = vadd.f32 %v540, %v542
    %v544 = vadd.f32 %v541, %v524
    %v545 = vmul.f32 %v524, %v338
    %v546 = vadd.f32 %v543, %v545
    %v547 = vadd.f32 %v544, %v527
    %v548 = vmul.f32 %v527, %v390
    %v549 = vadd.f32 %v546, %v548
    %v550 = vadd.f32 %v547, %v530
    %v551 = vmul.f32 %v530, %v442
    %v552 = vadd.f32 %v549, %v551
    %v553 = vadd.f32 %v550, %v533
    %v554 = vmul.f32 %v533, %v494
    %v555 = vadd.f32 %v552, %v554
    %v556 = vrcp.pop %v553
    %v557 = vmul.f32 %v555, %v556
    %559 = vrot.lane.b32.xlu0 %v557, 32
    %v560 = vpop.permute.xlu0 %559
    %562 = vst.msk [vmem:[#allocation2] sm:$0xff] %vm135, %v560
    // Predicated region
    $region10: #{tpu_custom_call.1} parent=1 // pred_check
      _
    $region11: #{tpu_custom_call.1} parent=1 // pred_check_branch
      %564 = sbr.rel (0) target = $region13
    $region12: #{tpu_custom_call.1} parent=1 // pred_region
      %566 = vsyncadd [#allocation3], 0
      %s568 = sshll.u32 [#allocation2], 4
      %s569 = int_to_ptr.vmem [resolvable:$true] %s568
      %s570 = sshll.u32 %s2, 4
      %s571 = int_to_ptr.hbm [resolvable:$true] %s570
      %573 = dma.vmem_to_hbm [thread:$0]  %s569, 128, %s571, [#allocation3]
    $region13: #{tpu_custom_call.1} parent=1 // pred_fallthru
      _
    // Predicated region
    $region14: #{tpu_custom_call.1} parent=1 // pred_check
      _
    $region15: #{tpu_custom_call.1} parent=1 // pred_check_branch
      %575 = sbr.rel (0) target = $region17
    $region16: #{tpu_custom_call.1} parent=1 // pred_region
      %577 = dma.done [#allocation3], 128
    $region17: #{tpu_custom_call.1} parent=1 // pred_fallthru
      _
    %578 = vsyncpa [#allocation3], 1

</llo_original>
